<compile_context>
chip_gen: v6e
topology: v6e:2x2x1
jax: 0.10.0
libtpu: 0.0.40
codegen_flags: <defaults>
</compile_context>

<pallas_src>
import functools

import jax
import jax.numpy as jnp
from jax.experimental import pallas as pl
from jax.experimental.pallas import tpu as pltpu


def _round_up(x, m):
    return ((x + m - 1) // m) * m


# ---------------------------------------------------------------------------
# Fused kernel: all GCN layers + output linear, single grid step, all-VMEM.
# ---------------------------------------------------------------------------
def fused_gcn_kernel(*refs, layers):
    """refs layout (inputs then output):
       x, adj[0..L-1], (w_l, b_l) for l = 0..L-1, w_out_pad, b_out_pad, out
    """
    x = refs[0][...]
    adj_refs = refs[1:1 + layers]
    wb_base = 1 + layers

    for l in range(layers):
        w = refs[wb_base + 2 * l][...]
        b = refs[wb_base + 2 * l + 1][...]
        # Reassociated GraphConv: adj @ (x @ W) + b  (x@W hoisted, done once)
        xw = jnp.dot(x, w, preferred_element_type=jnp.float32)
        h = jnp.dot(adj_refs[l][...], xw, preferred_element_type=jnp.float32) + b
        x = jnp.maximum(h, 0.0)          # ReLU; dropout = identity (eval mode)

    w_out = refs[wb_base + 2 * layers][...]
    b_out = refs[wb_base + 2 * layers + 1][...]
    out_ref = refs[-1]
    out_ref[...] = jnp.dot(x, w_out, preferred_element_type=jnp.float32) + b_out


# ---------------------------------------------------------------------------
# Wrapper
# ---------------------------------------------------------------------------
def net_forward(x, adjs, params):
    """Net.forward: GCN layers (+ReLU, eval-mode dropout) then gc_out."""
    layers = len(params["gcs"])
    N, nfeat = x.shape
    w_out, b_out = params["gc_out"]
    nhid = w_out.shape[0]
    num_classes = w_out.shape[1]

    # Lane-dense output: pad class dim up to a multiple of 128 lanes.
    c_pad = _round_up(num_classes, 128)
    w_out_p = jnp.zeros((nhid, c_pad), jnp.float32).at[:, :num_classes].set(w_out)
    b_out_p = jnp.zeros((1, c_pad), jnp.float32).at[:, :num_classes].set(
        b_out.reshape(1, num_classes))

    inputs = [x]
    in_specs = [pl.BlockSpec((N, nfeat), lambda i: (0, 0))]
    for l in range(layers):
        inputs.append(adjs[l])
        in_specs.append(pl.BlockSpec((N, N), lambda i: (0, 0)))
    for (w, b) in params["gcs"]:
        fin, fout = w.shape
        inputs.append(w)
        in_specs.append(pl.BlockSpec((fin, fout), lambda i: (0, 0)))
        inputs.append(b.reshape(1, fout))
        in_specs.append(pl.BlockSpec((1, fout), lambda i: (0, 0)))
    inputs.append(w_out_p)
    in_specs.append(pl.BlockSpec((nhid, c_pad), lambda i: (0, 0)))
    inputs.append(b_out_p)
    in_specs.append(pl.BlockSpec((1, c_pad), lambda i: (0, 0)))

    out_padded = pl.pallas_call(
        functools.partial(fused_gcn_kernel, layers=layers),
        out_shape=jax.ShapeDtypeStruct((N, c_pad), jnp.float32),
        grid_spec=pltpu.PrefetchScalarGridSpec(
            num_scalar_prefetch=0,
            grid=(1,),
            in_specs=in_specs,
            out_specs=pl.BlockSpec((N, c_pad), lambda i: (0, 0)),
        ),
        compiler_params=pltpu.CompilerParams(
            dimension_semantics=("arbitrary",),
            vmem_limit_bytes=64 * 1024 * 1024,
        ),
    )(*inputs)

    return out_padded[:, :num_classes]


# ---------------------------------------------------------------------------
# Deterministic parameter init (matches GraphConvolution / Linear init style)
# ---------------------------------------------------------------------------
def init_params(key, nfeat, nhid, num_classes, layers):
    keys = jax.random.split(key, 2 * layers + 2)
    gcs = []
    fin = nfeat
    for ell in range(layers):
        scale = 1.0 / jnp.sqrt(fin)
        w = jax.random.uniform(keys[2 * ell], (fin, nhid), jnp.float32, -scale, scale)
        b = jax.random.uniform(keys[2 * ell + 1], (nhid,), jnp.float32, -scale, scale)
        gcs.append((w, b))
        fin = nhid
    scale = 1.0 / jnp.sqrt(nhid)
    w_out = jax.random.uniform(keys[-2], (nhid, num_classes), jnp.float32, -scale, scale)
    b_out = jax.random.uniform(keys[-1], (num_classes,), jnp.float32, -scale, scale)
    return {"gcs": gcs, "gc_out": (w_out, b_out)}


# ---------------------------------------------------------------------------
if __name__ == "__main__":
    N = 64            # nodes
    nfeat = 32
    nhid = 32
    num_classes = 16
    layers = 2

    key = jax.random.PRNGKey(0)
    k_x, k_a, k_p = jax.random.split(key, 3)

    x = jax.random.normal(k_x, (N, nfeat), jnp.float32)

    # row-normalized dense adjacency matrices, one per layer
    adj_keys = jax.random.split(k_a, layers)
    adjs = []
    for ak in adj_keys:
        a = (jax.random.uniform(ak, (N, N)) < 0.1).astype(jnp.float32)
        a = a + jnp.eye(N, dtype=jnp.float32)
        deg = a.sum(axis=1, keepdims=True)
        adjs.append(a / deg)

    params = init_params(k_p, nfeat, nhid, num_classes, layers)

    out = net_forward(x, adjs, params)
    out = jax.block_until_ready(out)

    # reference check in plain JAX
    ref = x
    for ell, (w, b) in enumerate(params["gcs"]):
        ref = jnp.maximum(adjs[ell] @ ref @ w + b, 0.0)
    w_out, b_out = params["gc_out"]
    ref = ref @ w_out + b_out

    assert out.shape == (N, num_classes)
    assert jnp.allclose(out, ref, atol=1e-5, rtol=1e-5)
    print("KERNEL_OK")
</pallas_src>

<mosaic_0001>
module attributes {stable_mosaic.version = 11 : i64} {
  func.func @fused_gcn_kernel(%arg0: i32, %arg1: memref<64x32xf32, #tpu.memory_space<vmem>>, %arg2: memref<64x64xf32, #tpu.memory_space<vmem>>, %arg3: memref<64x64xf32, #tpu.memory_space<vmem>>, %arg4: memref<32x32xf32, #tpu.memory_space<vmem>>, %arg5: memref<1x32xf32, #tpu.memory_space<vmem>>, %arg6: memref<32x32xf32, #tpu.memory_space<vmem>>, %arg7: memref<1x32xf32, #tpu.memory_space<vmem>>, %arg8: memref<32x128xf32, #tpu.memory_space<vmem>>, %arg9: memref<1x128xf32, #tpu.memory_space<vmem>>, %arg10: memref<64x128xf32, #tpu.memory_space<vmem>>) attributes {dimension_semantics = [#tpu.dimension_semantics<arbitrary>], iteration_bounds = array<i64: 1>, scalar_prefetch = 0 : i64, scratch_operands = 0 : i64, tpu.core_type = #tpu.core_type<tc>, window_params = [{pipeline_mode = #tpu.pipeline_mode<synchronous>, transform_indices = @transform_0, window_bounds = array<i64: 64, 32>}, {pipeline_mode = #tpu.pipeline_mode<synchronous>, transform_indices = @transform_1, window_bounds = array<i64: 64, 64>}, {pipeline_mode = #tpu.pipeline_mode<synchronous>, transform_indices = @transform_2, window_bounds = array<i64: 64, 64>}, {pipeline_mode = #tpu.pipeline_mode<synchronous>, transform_indices = @transform_3, window_bounds = array<i64: 32, 32>}, {pipeline_mode = #tpu.pipeline_mode<synchronous>, transform_indices = @transform_4, window_bounds = array<i64: 1, 32>}, {pipeline_mode = #tpu.pipeline_mode<synchronous>, transform_indices = @transform_5, window_bounds = array<i64: 32, 32>}, {pipeline_mode = #tpu.pipeline_mode<synchronous>, transform_indices = @transform_6, window_bounds = array<i64: 1, 32>}, {pipeline_mode = #tpu.pipeline_mode<synchronous>, transform_indices = @transform_7, window_bounds = array<i64: 32, 128>}, {pipeline_mode = #tpu.pipeline_mode<synchronous>, transform_indices = @transform_8, window_bounds = array<i64: 1, 128>}, {pipeline_mode = #tpu.pipeline_mode<synchronous>, transform_indices = @transform_9, window_bounds = array<i64: 64, 128>}]} {
    %c0 = arith.constant 0 : index
    %c0_0 = arith.constant 0 : index
    %0 = vector.load %arg1[%c0, %c0_0] : memref<64x32xf32, #tpu.memory_space<vmem>>, vector<64x32xf32>
    %c0_1 = arith.constant 0 : index
    %c0_2 = arith.constant 0 : index
    %1 = vector.load %arg4[%c0_1, %c0_2] : memref<32x32xf32, #tpu.memory_space<vmem>>, vector<32x32xf32>
    %c0_3 = arith.constant 0 : index
    %c0_4 = arith.constant 0 : index
    %2 = vector.load %arg5[%c0_3, %c0_4] : memref<1x32xf32, #tpu.memory_space<vmem>>, vector<1x32xf32>
    %cst = arith.constant dense<0.000000e+00> : vector<64x32xf32>
    %3 = tpu.matmul %0, %1, %cst {dimension_numbers = #tpu.dot_dimension_numbers<[1], [0], [0], [1], [0, 0, 1, 1], [], []>} : vector<64x32xf32>, vector<32x32xf32>, vector<64x32xf32> -> vector<64x32xf32>
    %c0_5 = arith.constant 0 : index
    %c0_6 = arith.constant 0 : index
    %4 = vector.load %arg2[%c0_5, %c0_6] : memref<64x64xf32, #tpu.memory_space<vmem>>, vector<64x64xf32>
    %cst_7 = arith.constant dense<0.000000e+00> : vector<64x32xf32>
    %5 = tpu.matmul %4, %3, %cst_7 {dimension_numbers = #tpu.dot_dimension_numbers<[1], [0], [0], [1], [0, 0, 1, 1], [], []>} : vector<64x64xf32>, vector<64x32xf32>, vector<64x32xf32> -> vector<64x32xf32>
    %6 = vector.broadcast %2 : vector<1x32xf32> to vector<64x32xf32>
    %7 = arith.addf %5, %6 : vector<64x32xf32>
    %cst_8 = arith.constant 0.000000e+00 : f32
    %8 = vector.broadcast %cst_8 : f32 to vector<64x32xf32>
    %9 = arith.maximumf %7, %8 : vector<64x32xf32>
    %c0_9 = arith.constant 0 : index
    %c0_10 = arith.constant 0 : index
    %10 = vector.load %arg6[%c0_9, %c0_10] : memref<32x32xf32, #tpu.memory_space<vmem>>, vector<32x32xf32>
    %c0_11 = arith.constant 0 : index
    %c0_12 = arith.constant 0 : index
    %11 = vector.load %arg7[%c0_11, %c0_12] : memref<1x32xf32, #tpu.memory_space<vmem>>, vector<1x32xf32>
    %cst_13 = arith.constant dense<0.000000e+00> : vector<64x32xf32>
    %12 = tpu.matmul %9, %10, %cst_13 {dimension_numbers = #tpu.dot_dimension_numbers<[1], [0], [0], [1], [0, 0, 1, 1], [], []>} : vector<64x32xf32>, vector<32x32xf32>, vector<64x32xf32> -> vector<64x32xf32>
    %c0_14 = arith.constant 0 : index
    %c0_15 = arith.constant 0 : index
    %13 = vector.load %arg3[%c0_14, %c0_15] : memref<64x64xf32, #tpu.memory_space<vmem>>, vector<64x64xf32>
    %cst_16 = arith.constant dense<0.000000e+00> : vector<64x32xf32>
    %14 = tpu.matmul %13, %12, %cst_16 {dimension_numbers = #tpu.dot_dimension_numbers<[1], [0], [0], [1], [0, 0, 1, 1], [], []>} : vector<64x64xf32>, vector<64x32xf32>, vector<64x32xf32> -> vector<64x32xf32>
    %15 = vector.broadcast %11 : vector<1x32xf32> to vector<64x32xf32>
    %16 = arith.addf %14, %15 : vector<64x32xf32>
    %cst_17 = arith.constant 0.000000e+00 : f32
    %17 = vector.broadcast %cst_17 : f32 to vector<64x32xf32>
    %18 = arith.maximumf %16, %17 : vector<64x32xf32>
    %c0_18 = arith.constant 0 : index
    %c0_19 = arith.constant 0 : index
    %19 = vector.load %arg8[%c0_18, %c0_19] : memref<32x128xf32, #tpu.memory_space<vmem>>, vector<32x128xf32>
    %c0_20 = arith.constant 0 : index
    %c0_21 = arith.constant 0 : index
    %20 = vector.load %arg9[%c0_20, %c0_21] : memref<1x128xf32, #tpu.memory_space<vmem>>, vector<1x128xf32>
    %cst_22 = arith.constant dense<0.000000e+00> : vector<64x128xf32>
    %21 = tpu.matmul %18, %19, %cst_22 {dimension_numbers = #tpu.dot_dimension_numbers<[1], [0], [0], [1], [0, 0, 1, 1], [], []>} : vector<64x32xf32>, vector<32x128xf32>, vector<64x128xf32> -> vector<64x128xf32>
    %22 = vector.broadcast %20 : vector<1x128xf32> to vector<64x128xf32>
    %23 = arith.addf %21, %22 : vector<64x128xf32>
    %c0_23 = arith.constant 0 : index
    %c0_24 = arith.constant 0 : index
    %24 = vector.load %arg10[%c0_23, %c0_24] : memref<64x128xf32, #tpu.memory_space<vmem>>, vector<64x128xf32>
    tpu.vector_store %arg10[%c0_23, %c0_24], %23 {strides = array<i32>} : memref<64x128xf32, #tpu.memory_space<vmem>>, vector<64x128xf32>,
    return
  }
  func.func @transform_0(%arg0: i32) -> (i32, i32) {
    %c0_i32 = arith.constant 0 : i32
    %c0_i32_0 = arith.constant 0 : i32
    %c0_i32_1 = arith.constant 0 : i32
    return %c0_i32, %c0_i32_0 : i32, i32
  }
  func.func @transform_1(%arg0: i32) -> (i32, i32) {
    %c0_i32 = arith.constant 0 : i32
    %c0_i32_0 = arith.constant 0 : i32
    %c0_i32_1 = arith.constant 0 : i32
    return %c0_i32, %c0_i32_0 : i32, i32
  }
  func.func @transform_2(%arg0: i32) -> (i32, i32) {
    %c0_i32 = arith.constant 0 : i32
    %c0_i32_0 = arith.constant 0 : i32
    %c0_i32_1 = arith.constant 0 : i32
    return %c0_i32, %c0_i32_0 : i32, i32
  }
  func.func @transform_3(%arg0: i32) -> (i32, i32) {
    %c0_i32 = arith.constant 0 : i32
    %c0_i32_0 = arith.constant 0 : i32
    %c0_i32_1 = arith.constant 0 : i32
    return %c0_i32, %c0_i32_0 : i32, i32
  }
  func.func @transform_4(%arg0: i32) -> (i32, i32) {
    %c0_i32 = arith.constant 0 : i32
    %c0_i32_0 = arith.constant 0 : i32
    %c0_i32_1 = arith.constant 0 : i32
    return %c0_i32, %c0_i32_0 : i32, i32
  }
  func.func @transform_5(%arg0: i32) -> (i32, i32) {
    %c0_i32 = arith.constant 0 : i32
    %c0_i32_0 = arith.constant 0 : i32
    %c0_i32_1 = arith.constant 0 : i32
    return %c0_i32, %c0_i32_0 : i32, i32
  }
  func.func @transform_6(%arg0: i32) -> (i32, i32) {
    %c0_i32 = arith.constant 0 : i32
    %c0_i32_0 = arith.constant 0 : i32
    %c0_i32_1 = arith.constant 0 : i32
    return %c0_i32, %c0_i32_0 : i32, i32
  }
  func.func @transform_7(%arg0: i32) -> (i32, i32) {
    %c0_i32 = arith.constant 0 : i32
    %c0_i32_0 = arith.constant 0 : i32
    %c0_i32_1 = arith.constant 0 : i32
    return %c0_i32, %c0_i32_0 : i32, i32
  }
  func.func @transform_8(%arg0: i32) -> (i32, i32) {
    %c0_i32 = arith.constant 0 : i32
    %c0_i32_0 = arith.constant 0 : i32
    %c0_i32_1 = arith.constant 0 : i32
    return %c0_i32, %c0_i32_0 : i32, i32
  }
  func.func @transform_9(%arg0: i32) -> (i32, i32) {
    %c0_i32 = arith.constant 0 : i32
    %c0_i32_0 = arith.constant 0 : i32
    %c0_i32_1 = arith.constant 0 : i32
    return %c0_i32, %c0_i32_0 : i32, i32
  }
}

</mosaic_0001>

<llo_original>
// kernel: tpu_custom_call.1
$region0: #{tpu_custom_call.1}
  #allocation0 [shape = 'u32[]', space=smem, size = 0x4, offset = 0x4, fixed_abs, tag = 'smem constant byte address 0x4 - core index']
  #allocation1 [shape = 'u32[144,128]{1,0:T(1,128)}', space=vmem, size = 0x12000, scoped, tag = 'internal scratch']
  %s0 = inlined_call_operand.vmem [shape: f32[64,32], index: 0, kind: input, shape index: {}]
  %s1 = inlined_call_operand.vmem [shape: f32[64,64], index: 1, kind: input, shape index: {}]
  %s2 = inlined_call_operand.hbm [shape: f32[64,64], index: 2, kind: input, shape index: {}]
  %s3 = inlined_call_operand.vmem [shape: f32[32,32], index: 3, kind: input, shape index: {}]
  %s4 = inlined_call_operand.vmem [shape: f32[1,32], index: 4, kind: input, shape index: {}]
  %s5 = inlined_call_operand.hbm [shape: f32[32,32], index: 5, kind: input, shape index: {}]
  %s6 = inlined_call_operand.vmem [shape: f32[1,32], index: 6, kind: input, shape index: {}]
  %s7 = inlined_call_operand.hbm [shape: f32[32,128], index: 7, kind: input, shape index: {}]
  %s8 = inlined_call_operand.vmem [shape: f32[1,128], index: 8, kind: input, shape index: {}]
  %s9 = inlined_call_operand.hbm [shape: f32[64,128], index: 9, kind: output, shape index: {}]
  %s10 = sld [smem:[#allocation0]]
  $region58: #{tpu_custom_call.1} parent=0
    _
  %s12 = ssub.s32 1, %s10
  %s13 = scalar_select 0, %s12, %s10
  $region1: #{tpu_custom_call.1} parent=0
    #allocation2 [shape = 'u8[32768]{0}', space=vmem, size = 0x8000, scoped, tag = 'input window, operand 2, single buffered']
    #allocation3 [shape = 's32[1]{0}', space=sflag, size = 0x4, scoped, tag = 'scoped memory for tpu_custom_call.1']
    #allocation4 [shape = 's32[1]{0}', space=sflag, size = 0x4, scoped, tag = 'scoped memory for tpu_custom_call.1']
    #allocation5 [shape = 'u8[16384]{0}', space=vmem, size = 0x4000, scoped, tag = 'input window, operand 5, single buffered']
    #allocation6 [shape = 's32[1]{0}', space=sflag, size = 0x4, scoped, tag = 'scoped memory for tpu_custom_call.1']
    #allocation7 [shape = 'u8[16384]{0}', space=vmem, size = 0x4000, scoped, tag = 'input window, operand 7, single buffered']
    #allocation8 [shape = 'u8[32768]{0}', space=vmem, size = 0x8000, scoped, tag = 'output window, operand 0, single buffered']
    %14 = vsyncpa [#allocation3], 0
    %15 = vsyncpa [#allocation6], 0
    %16 = vsyncpa [#allocation4], 0
    // Predicated region
    $region2: #{tpu_custom_call.1} parent=1 // pred_check
      _
    $region3: #{tpu_custom_call.1} parent=1 // pred_check_branch
      %18 = sbr.rel (0) target = $region5
    $region4: #{tpu_custom_call.1} parent=1 // pred_region
      _
    $region5: #{tpu_custom_call.1} parent=1 // pred_fallthru
      _
    // Predicated region
    $region6: #{tpu_custom_call.1} parent=1 // pred_check
      _
    $region7: #{tpu_custom_call.1} parent=1 // pred_check_branch
      %20 = sbr.rel (0) target = $region9
    $region8: #{tpu_custom_call.1} parent=1 // pred_region
      _
    $region9: #{tpu_custom_call.1} parent=1 // pred_fallthru
      _
    // Predicated region
    $region10: #{tpu_custom_call.1} parent=1 // pred_check
      _
    $region11: #{tpu_custom_call.1} parent=1 // pred_check_branch
      %22 = sbr.rel (0) target = $region13
    $region12: #{tpu_custom_call.1} parent=1 // pred_region
      %s24 = ssub.s32 1024, 1024
      %25 = vsyncadd [#allocation3], %s24
      %s26 = sshll.u32 [#allocation2], 4
      %s27 = int_to_ptr.vmem [resolvable:$true] %s26
      %32 = dma.hbm_to_vmem [thread:$0]  %s2, 1024, %s27, [#allocation3], 128, 128, 8
    $region13: #{tpu_custom_call.1} parent=1 // pred_fallthru
      _
    // Predicated region
    $region14: #{tpu_custom_call.1} parent=1 // pred_check
      _
    $region15: #{tpu_custom_call.1} parent=1 // pred_check_branch
      %34 = sbr.rel (0) target = $region17
    $region16: #{tpu_custom_call.1} parent=1 // pred_region
      _
    $region17: #{tpu_custom_call.1} parent=1 // pred_fallthru
      _
    // Predicated region
    $region18: #{tpu_custom_call.1} parent=1 // pred_check
      _
    $region19: #{tpu_custom_call.1} parent=1 // pred_check_branch
      %36 = sbr.rel (0) target = $region21
    $region20: #{tpu_custom_call.1} parent=1 // pred_region
      _
    $region21: #{tpu_custom_call.1} parent=1 // pred_fallthru
      _
    // Predicated region
    $region22: #{tpu_custom_call.1} parent=1 // pred_check
      _
    $region23: #{tpu_custom_call.1} parent=1 // pred_check_branch
      %38 = sbr.rel (0) target = $region25
    $region24: #{tpu_custom_call.1} parent=1 // pred_region
      %s40 = ssub.s32 512, 512
      %41 = vsyncadd [#allocation6], %s40
      %s42 = sshll.u32 [#allocation5], 4
      %s43 = int_to_ptr.vmem [resolvable:$true] %s42
      %48 = dma.hbm_to_vmem [thread:$0]  %s5, 512, %s43, [#allocation6], 128, 128, 8
    $region25: #{tpu_custom_call.1} parent=1 // pred_fallthru
      _
    // Predicated region
    $region26: #{tpu_custom_call.1} parent=1 // pred_check
      _
    $region27: #{tpu_custom_call.1} parent=1 // pred_check_branch
      %50 = sbr.rel (0) target = $region29
    $region28: #{tpu_custom_call.1} parent=1 // pred_region
      _
    $region29: #{tpu_custom_call.1} parent=1 // pred_fallthru
      _
    // Predicated region
    $region30: #{tpu_custom_call.1} parent=1 // pred_check
      _
    $region31: #{tpu_custom_call.1} parent=1 // pred_check_branch
      %52 = sbr.rel (0) target = $region33
    $region32: #{tpu_custom_call.1} parent=1 // pred_region
      %s54 = ssub.s32 512, 512
      %55 = vsyncadd [#allocation6], %s54
      %s56 = sshll.u32 [#allocation7], 4
      %s57 = int_to_ptr.vmem [resolvable:$true] %s56
      %62 = dma.hbm_to_vmem [thread:$0]  %s7, 512, %s57, [#allocation6], 128, 128, 8
    $region33: #{tpu_custom_call.1} parent=1 // pred_fallthru
      _
    // Predicated region
    $region34: #{tpu_custom_call.1} parent=1 // pred_check
      _
    $region35: #{tpu_custom_call.1} parent=1 // pred_check_branch
      %64 = sbr.rel (0) target = $region37
    $region36: #{tpu_custom_call.1} parent=1 // pred_region
      _
    $region37: #{tpu_custom_call.1} parent=1 // pred_fallthru
      _
    // Predicated region
    $region38: #{tpu_custom_call.1} parent=1 // pred_check
      _
    $region39: #{tpu_custom_call.1} parent=1 // pred_check_branch
      %66 = sbr.rel (0) target = $region41
    $region40: #{tpu_custom_call.1} parent=1 // pred_region
      %67 = dma.done [#allocation3], 1024
    $region41: #{tpu_custom_call.1} parent=1 // pred_fallthru
      _
    // Predicated region
    $region42: #{tpu_custom_call.1} parent=1 // pred_check
      _
    $region43: #{tpu_custom_call.1} parent=1 // pred_check_branch
      %69 = sbr.rel (0) target = $region45
    $region44: #{tpu_custom_call.1} parent=1 // pred_region
      %70 = dma.done [#allocation6], 512
    $region45: #{tpu_custom_call.1} parent=1 // pred_fallthru
      _
    // Predicated region
    $region46: #{tpu_custom_call.1} parent=1 // pred_check
      _
    $region47: #{tpu_custom_call.1} parent=1 // pred_check_branch
      %72 = sbr.rel (0) target = $region49
    $region48: #{tpu_custom_call.1} parent=1 // pred_region
      %73 = dma.done [#allocation6], 512
    $region49: #{tpu_custom_call.1} parent=1 // pred_fallthru
      _
    %v74 = vld [vmem:[%s0] sm:$0xff]
    %v75 = vld [vmem:[%s0 + $0x8] sm:$0xff]
    %v76 = vld [vmem:[%s0 + $0x10] sm:$0xff]
    %v77 = vld [vmem:[%s0 + $0x18] sm:$0xff]
    %v78 = vld [vmem:[%s0 + $0x20] sm:$0xff]
    %v79 = vld [vmem:[%s0 + $0x28] sm:$0xff]
    %v80 = vld [vmem:[%s0 + $0x30] sm:$0xff]
    %v81 = vld [vmem:[%s0 + $0x38] sm:$0xff]
    %v82 = vld [vmem:[%s3] sm:$0xff]
    %v83 = vld [vmem:[%s3 + $0x8] sm:$0xff]
    %v84 = vld [vmem:[%s3 + $0x10] sm:$0xff]
    %v85 = vld [vmem:[%s3 + $0x18] sm:$0xff]
    %v86 = vld [vmem:[%s4] sm:$0x1]
    %vm87 = vcmask 261120
    %v89 = vsel %vm87, %v74, 0
    %v92 = vsel %vm87, %v75, 0
    %v95 = vsel %vm87, %v76, 0
    %v98 = vsel %vm87, %v77, 0
    %v101 = vsel %vm87, %v78, 0
    %v104 = vsel %vm87, %v79, 0
    %v107 = vsel %vm87, %v80, 0
    %v110 = vsel %vm87, %v81, 0
    %112 = vmatprep.subr.mxu0 0.0
    %113 = vmatpush1.msra.mxu0 0.0
    %114 = vmatprep.subr.mxu0 0.0
    %115 = vmatpush1.msra.mxu0 0.0
    %116 = vmatprep.subr.mxu0 0.0
    %117 = vmatpush1.msra.mxu0 0.0
    %118 = vmatprep.subr.mxu0 0.0
    %119 = vmatpush1.msra.mxu0 0.0
    %120 = vmatprep.subr.mxu0 0.0
    %121 = vmatpush1.msra.mxu0 0.0
    %122 = vmatprep.subr.mxu0 0.0
    %123 = vmatpush1.msra.mxu0 0.0
    %124 = vmatprep.subr.mxu0 0.0
    %125 = vmatpush1.msra.mxu0 0.0
    %126 = vmatprep.subr.mxu0 0.0
    %127 = vmatpush1.msra.mxu0 0.0
    %128 = vmatprep.subr.mxu0 0.0
    %129 = vmatpush1.msra.mxu0 0.0
    %130 = vmatprep.subr.mxu0 0.0
    %131 = vmatpush1.msra.mxu0 0.0
    %132 = vmatprep.subr.mxu0 0.0
    %133 = vmatpush1.msra.mxu0 0.0
    %134 = vmatprep.subr.mxu0 0.0
    %135 = vmatpush1.msra.mxu0 0.0
    %136 = vmatprep.subr.mxu0 0.0
    %137 = vmatpush1.msra.mxu0 %v85
    %138 = vmatprep.subr.mxu0 0.0
    %139 = vmatpush1.msra.mxu0 %v84
    %140 = vmatprep.subr.mxu0 0.0
    %141 = vmatpush1.msra.mxu0 %v83
    %142 = vmatprep.subr.mxu0 0.0
    %143 = vmatpush1.msra.mxu0 %v82
    %144 = vmatprep.subr.mxu0 0.0
    %145 = vmatpush2.msra.mxu0 0.0
    %146 = vmatprep.subr.mxu0 0.0
    %147 = vmatpush2.msra.mxu0 0.0
    %148 = vmatprep.subr.mxu0 0.0
    %149 = vmatpush2.msra.mxu0 0.0
    %150 = vmatprep.subr.mxu0 0.0
    %151 = vmatpush2.msra.mxu0 0.0
    %152 = vmatprep.subr.mxu0 0.0
    %153 = vmatpush2.msra.mxu0 0.0
    %154 = vmatprep.subr.mxu0 0.0
    %155 = vmatpush2.msra.mxu0 0.0
    %156 = vmatprep.subr.mxu0 0.0
    %157 = vmatpush2.msra.mxu0 0.0
    %158 = vmatprep.subr.mxu0 0.0
    %159 = vmatpush2.msra.mxu0 0.0
    %160 = vmatprep.subr.mxu0 0.0
    %161 = vmatpush2.msra.mxu0 0.0
    %162 = vmatprep.subr.mxu0 0.0
    %163 = vmatpush2.msra.mxu0 0.0
    %164 = vmatprep.subr.mxu0 0.0
    %165 = vmatpush2.msra.mxu0 0.0
    %166 = vmatprep.subr.mxu0 0.0
    %167 = vmatpush2.msra.mxu0 0.0
    %168 = vmatprep.subr.mxu0 0.0
    %169 = vmatpush2.msra.mxu0 0.0
    %170 = vmatprep.subr.mxu0 0.0
    %171 = vmatpush2.msra.mxu0 0.0
    %172 = vmatprep.subr.mxu0 0.0
    %173 = vmatpush2.msra.mxu0 0.0
    %174 = vmatprep.subr.mxu0 0.0
    %175 = vmatpush2.msra.mxu0 0.0
    %176 = vmatprep.mubr.f32.mxu0 0.0
    %177 = vmatmul.mubr.f32.gmra.mxu0 %v89
    %v178 = vpop.f32.mrf.mxu0
    %v179 = vadd.f32 0.0, %v178
    %v180 = vpop.f32.mrf.mxu0
    %181 = vmatprep.mubr.f32.mxu0 0.0
    %182 = vmatmul.mubr.f32.gmra.mxu0 %v92
    %v183 = vpop.f32.mrf.mxu0
    %v184 = vadd.f32 0.0, %v183
    %v185 = vpop.f32.mrf.mxu0
    %186 = vmatprep.mubr.f32.mxu0 0.0
    %187 = vmatmul.mubr.f32.gmra.mxu0 %v95
    %v188 = vpop.f32.mrf.mxu0
    %v189 = vadd.f32 0.0, %v188
    %v190 = vpop.f32.mrf.mxu0
    %191 = vmatprep.mubr.f32.mxu0 0.0
    %192 = vmatmul.mubr.f32.gmra.mxu0 %v98
    %v193 = vpop.f32.mrf.mxu0
    %v194 = vadd.f32 0.0, %v193
    %v195 = vpop.f32.mrf.mxu0
    %196 = vmatprep.mubr.f32.mxu0 0.0
    %197 = vmatmul.mubr.f32.gmra.mxu0 %v101
    %v198 = vpop.f32.mrf.mxu0
    %v199 = vadd.f32 0.0, %v198
    %v200 = vpop.f32.mrf.mxu0
    %201 = vmatprep.mubr.f32.mxu0 0.0
    %202 = vmatmul.mubr.f32.gmra.mxu0 %v104
    %v203 = vpop.f32.mrf.mxu0
    %v204 = vadd.f32 0.0, %v203
    %v205 = vpop.f32.mrf.mxu0
    %206 = vmatprep.mubr.f32.mxu0 0.0
    %207 = vmatmul.mubr.f32.gmra.mxu0 %v107
    %v208 = vpop.f32.mrf.mxu0
    %v209 = vadd.f32 0.0, %v208
    %v210 = vpop.f32.mrf.mxu0
    %211 = vmatprep.mubr.f32.mxu0 0.0
    %212 = vmatmul.mubr.f32.gmra.mxu0 %v110
    %v213 = vpop.f32.mrf.mxu0
    %v214 = vadd.f32 0.0, %v213
    %v215 = vpop.f32.mrf.mxu0
    %216 = vdwg.mxu0
    %v217 = vld [vmem:[%s1] sm:$0xff]
    %v218 = vld [vmem:[%s1 + $0x8] sm:$0xff]
    %v219 = vld [vmem:[%s1 + $0x10] sm:$0xff]
    %v220 = vld [vmem:[%s1 + $0x18] sm:$0xff]
    %v221 = vld [vmem:[%s1 + $0x20] sm:$0xff]
    %v222 = vld [vmem:[%s1 + $0x28] sm:$0xff]
    %v223 = vld [vmem:[%s1 + $0x30] sm:$0xff]
    %v224 = vld [vmem:[%s1 + $0x38] sm:$0xff]
    %v226 = vlaneseq
    %v227 = vshrl.u32 %v226, 7
    %v228 = vsub.s32 0, %v227
    %v229 = vrot.slane %v86, %v228
    %vm231 = vcmask 523264
    %v233 = vsel %vm231, %v217, 0
    %v236 = vsel %vm231, %v218, 0
    %v239 = vsel %vm231, %v219, 0
    %v242 = vsel %vm231, %v220, 0
    %v245 = vsel %vm231, %v221, 0
    %v248 = vsel %vm231, %v222, 0
    %v251 = vsel %vm231, %v223, 0
    %v254 = vsel %vm231, %v224, 0
    %256 = vmatprep.subr.mxu0 0.0
    %257 = vmatpush1.msra.mxu0 0.0
    %258 = vmatprep.subr.mxu0 0.0
    %259 = vmatpush1.msra.mxu0 0.0
    %260 = vmatprep.subr.mxu0 0.0
    %261 = vmatpush1.msra.mxu0 0.0
    %262 = vmatprep.subr.mxu0 0.0
    %263 = vmatpush1.msra.mxu0 0.0
    %264 = vmatprep.subr.mxu0 0.0
    %265 = vmatpush1.msra.mxu0 0.0
    %266 = vmatprep.subr.mxu0 0.0
    %267 = vmatpush1.msra.mxu0 0.0
    %268 = vmatprep.subr.mxu0 0.0
    %269 = vmatpush1.msra.mxu0 0.0
    %270 = vmatprep.subr.mxu0 0.0
    %271 = vmatpush1.msra.mxu0 0.0
    %272 = vmatprep.subr.mxu0 0.0
    %273 = vmatpush1.msra.mxu0 %v214
    %274 = vmatprep.subr.mxu0 0.0
    %275 = vmatpush1.msra.mxu0 %v209
    %276 = vmatprep.subr.mxu0 0.0
    %277 = vmatpush1.msra.mxu0 %v204
    %278 = vmatprep.subr.mxu0 0.0
    %279 = vmatpush1.msra.mxu0 %v199
    %280 = vmatprep.subr.mxu0 0.0
    %281 = vmatpush1.msra.mxu0 %v194
    %282 = vmatprep.subr.mxu0 0.0
    %283 = vmatpush1.msra.mxu0 %v189
    %284 = vmatprep.subr.mxu0 0.0
    %285 = vmatpush1.msra.mxu0 %v184
    %286 = vmatprep.subr.mxu0 0.0
    %287 = vmatpush1.msra.mxu0 %v179
    %288 = vmatprep.subr.mxu0 0.0
    %289 = vmatpush2.msra.mxu0 0.0
    %290 = vmatprep.subr.mxu0 0.0
    %291 = vmatpush2.msra.mxu0 0.0
    %292 = vmatprep.subr.mxu0 0.0
    %293 = vmatpush2.msra.mxu0 0.0
    %294 = vmatprep.subr.mxu0 0.0
    %295 = vmatpush2.msra.mxu0 0.0
    %296 = vmatprep.subr.mxu0 0.0
    %297 = vmatpush2.msra.mxu0 0.0
    %298 = vmatprep.subr.mxu0 0.0
    %299 = vmatpush2.msra.mxu0 0.0
    %300 = vmatprep.subr.mxu0 0.0
    %301 = vmatpush2.msra.mxu0 0.0
    %302 = vmatprep.subr.mxu0 0.0
    %303 = vmatpush2.msra.mxu0 0.0
    %304 = vmatprep.subr.mxu0 0.0
    %305 = vmatpush2.msra.mxu0 0.0
    %306 = vmatprep.subr.mxu0 0.0
    %307 = vmatpush2.msra.mxu0 0.0
    %308 = vmatprep.subr.mxu0 0.0
    %309 = vmatpush2.msra.mxu0 0.0
    %310 = vmatprep.subr.mxu0 0.0
    %311 = vmatpush2.msra.mxu0 0.0
    %312 = vmatprep.subr.mxu0 0.0
    %313 = vmatpush2.msra.mxu0 0.0
    %314 = vmatprep.subr.mxu0 0.0
    %315 = vmatpush2.msra.mxu0 0.0
    %316 = vmatprep.subr.mxu0 0.0
    %317 = vmatpush2.msra.mxu0 0.0
    %318 = vmatprep.subr.mxu0 0.0
    %319 = vmatpush2.msra.mxu0 0.0
    %320 = vmatprep.mubr.f32.mxu0 0.0
    %321 = vmatmul.mubr.f32.gmra.mxu0 %v233
    %v322 = vpop.f32.mrf.mxu0
    %v323 = vadd.f32 %v229, %v322
    %v324 = vpop.f32.mrf.mxu0
    %325 = vmatprep.mubr.f32.mxu0 0.0
    %326 = vmatmul.mubr.f32.gmra.mxu0 %v236
    %v327 = vpop.f32.mrf.mxu0
    %v328 = vadd.f32 %v229, %v327
    %v329 = vpop.f32.mrf.mxu0
    %330 = vmatprep.mubr.f32.mxu0 0.0
    %331 = vmatmul.mubr.f32.gmra.mxu0 %v239
    %v332 = vpop.f32.mrf.mxu0
    %v333 = vadd.f32 %v229, %v332
    %v334 = vpop.f32.mrf.mxu0
    %335 = vmatprep.mubr.f32.mxu0 0.0
    %336 = vmatmul.mubr.f32.gmra.mxu0 %v242
    %v337 = vpop.f32.mrf.mxu0
    %v338 = vadd.f32 %v229, %v337
    %v339 = vpop.f32.mrf.mxu0
    %340 = vmatprep.mubr.f32.mxu0 0.0
    %341 = vmatmul.mubr.f32.gmra.mxu0 %v245
    %v342 = vpop.f32.mrf.mxu0
    %v343 = vadd.f32 %v229, %v342
    %v344 = vpop.f32.mrf.mxu0
    %345 = vmatprep.mubr.f32.mxu0 0.0
    %346 = vmatmul.mubr.f32.gmra.mxu0 %v248
    %v347 = vpop.f32.mrf.mxu0
    %v348 = vadd.f32 %v229, %v347
    %v349 = vpop.f32.mrf.mxu0
    %350 = vmatprep.mubr.f32.mxu0 0.0
    %351 = vmatmul.mubr.f32.gmra.mxu0 %v251
    %v352 = vpop.f32.mrf.mxu0
    %v353 = vadd.f32 %v229, %v352
    %v354 = vpop.f32.mrf.mxu0
    %355 = vmatprep.mubr.f32.mxu0 0.0
    %356 = vmatmul.mubr.f32.gmra.mxu0 %v254
    %v357 = vpop.f32.mrf.mxu0
    %v358 = vadd.f32 %v229, %v357
    %v359 = vpop.f32.mrf.mxu0
    %360 = vdwg.mxu0
    %v361 = vmax.f32 %v323, 0.0
    %v362 = vmax.f32 %v328, 0.0
    %v363 = vmax.f32 %v333, 0.0
    %v364 = vmax.f32 %v338, 0.0
    %v365 = vmax.f32 %v343, 0.0
    %v366 = vmax.f32 %v348, 0.0
    %v367 = vmax.f32 %v353, 0.0
    %v368 = vmax.f32 %v358, 0.0
    %v369 = vld [vmem:[#allocation5] sm:$0xff]
    %v370 = vld [vmem:[#allocation5 + $0x8] sm:$0xff]
    %v371 = vld [vmem:[#allocation5 + $0x10] sm:$0xff]
    %v372 = vld [vmem:[#allocation5 + $0x18] sm:$0xff]
    %v373 = vld [vmem:[%s6] sm:$0x1]
    %v375 = vsel %vm87, %v361, 0
    %v378 = vsel %vm87, %v362, 0
    %v381 = vsel %vm87, %v363, 0
    %v384 = vsel %vm87, %v364, 0
    %v387 = vsel %vm87, %v365, 0
    %v390 = vsel %vm87, %v366, 0
    %v393 = vsel %vm87, %v367, 0
    %v396 = vsel %vm87, %v368, 0
    %398 = vmatprep.subr.mxu0 0.0
    %399 = vmatpush1.msra.mxu0 0.0
    %400 = vmatprep.subr.mxu0 0.0
    %401 = vmatpush1.msra.mxu0 0.0
    %402 = vmatprep.subr.mxu0 0.0
    %403 = vmatpush1.msra.mxu0 0.0
    %404 = vmatprep.subr.mxu0 0.0
    %405 = vmatpush1.msra.mxu0 0.0
    %406 = vmatprep.subr.mxu0 0.0
    %407 = vmatpush1.msra.mxu0 0.0
    %408 = vmatprep.subr.mxu0 0.0
    %409 = vmatpush1.msra.mxu0 0.0
    %410 = vmatprep.subr.mxu0 0.0
    %411 = vmatpush1.msra.mxu0 0.0
    %412 = vmatprep.subr.mxu0 0.0
    %413 = vmatpush1.msra.mxu0 0.0
    %414 = vmatprep.subr.mxu0 0.0
    %415 = vmatpush1.msra.mxu0 0.0
    %416 = vmatprep.subr.mxu0 0.0
    %417 = vmatpush1.msra.mxu0 0.0
    %418 = vmatprep.subr.mxu0 0.0
    %419 = vmatpush1.msra.mxu0 0.0
    %420 = vmatprep.subr.mxu0 0.0
    %421 = vmatpush1.msra.mxu0 0.0
    %422 = vmatprep.subr.mxu0 0.0
    %423 = vmatpush1.msra.mxu0 %v372
    %424 = vmatprep.subr.mxu0 0.0
    %425 = vmatpush1.msra.mxu0 %v371
    %426 = vmatprep.subr.mxu0 0.0
    %427 = vmatpush1.msra.mxu0 %v370
    %428 = vmatprep.subr.mxu0 0.0
    %429 = vmatpush1.msra.mxu0 %v369
    %430 = vmatprep.subr.mxu0 0.0
    %431 = vmatpush2.msra.mxu0 0.0
    %432 = vmatprep.subr.mxu0 0.0
    %433 = vmatpush2.msra.mxu0 0.0
    %434 = vmatprep.subr.mxu0 0.0
    %435 = vmatpush2.msra.mxu0 0.0
    %436 = vmatprep.subr.mxu0 0.0
    %437 = vmatpush2.msra.mxu0 0.0
    %438 = vmatprep.subr.mxu0 0.0
    %439 = vmatpush2.msra.mxu0 0.0
    %440 = vmatprep.subr.mxu0 0.0
    %441 = vmatpush2.msra.mxu0 0.0
    %442 = vmatprep.subr.mxu0 0.0
    %443 = vmatpush2.msra.mxu0 0.0
    %444 = vmatprep.subr.mxu0 0.0
    %445 = vmatpush2.msra.mxu0 0.0
    %446 = vmatprep.subr.mxu0 0.0
    %447 = vmatpush2.msra.mxu0 0.0
    %448 = vmatprep.subr.mxu0 0.0
    %449 = vmatpush2.msra.mxu0 0.0
    %450 = vmatprep.subr.mxu0 0.0
    %451 = vmatpush2.msra.mxu0 0.0
    %452 = vmatprep.subr.mxu0 0.0
    %453 = vmatpush2.msra.mxu0 0.0
    %454 = vmatprep.subr.mxu0 0.0
    %455 = vmatpush2.msra.mxu0 0.0
    %456 = vmatprep.subr.mxu0 0.0
    %457 = vmatpush2.msra.mxu0 0.0
    %458 = vmatprep.subr.mxu0 0.0
    %459 = vmatpush2.msra.mxu0 0.0
    %460 = vmatprep.subr.mxu0 0.0
    %461 = vmatpush2.msra.mxu0 0.0
    %462 = vmatprep.mubr.f32.mxu0 0.0
    %463 = vmatmul.mubr.f32.gmra.mxu0 %v375
    %v464 = vpop.f32.mrf.mxu0
    %v465 = vadd.f32 0.0, %v464
    %v466 = vpop.f32.mrf.mxu0
    %467 = vmatprep.mubr.f32.mxu0 0.0
    %468 = vmatmul.mubr.f32.gmra.mxu0 %v378
    %v469 = vpop.f32.mrf.mxu0
    %v470 = vadd.f32 0.0, %v469
    %v471 = vpop.f32.mrf.mxu0
    %472 = vmatprep.mubr.f32.mxu0 0.0
    %473 = vmatmul.mubr.f32.gmra.mxu0 %v381
    %v474 = vpop.f32.mrf.mxu0
    %v475 = vadd.f32 0.0, %v474
    %v476 = vpop.f32.mrf.mxu0
    %477 = vmatprep.mubr.f32.mxu0 0.0
    %478 = vmatmul.mubr.f32.gmra.mxu0 %v384
    %v479 = vpop.f32.mrf.mxu0
    %v480 = vadd.f32 0.0, %v479
    %v481 = vpop.f32.mrf.mxu0
    %482 = vmatprep.mubr.f32.mxu0 0.0
    %483 = vmatmul.mubr.f32.gmra.mxu0 %v387
    %v484 = vpop.f32.mrf.mxu0
    %v485 = vadd.f32 0.0, %v484
    %v486 = vpop.f32.mrf.mxu0
    %487 = vmatprep.mubr.f32.mxu0 0.0
    %488 = vmatmul.mubr.f32.gmra.mxu0 %v390
    %v489 = vpop.f32.mrf.mxu0
    %v490 = vadd.f32 0.0, %v489
    %v491 = vpop.f32.mrf.mxu0
    %492 = vmatprep.mubr.f32.mxu0 0.0
    %493 = vmatmul.mubr.f32.gmra.mxu0 %v393
    %v494 = vpop.f32.mrf.mxu0
    %v495 = vadd.f32 0.0, %v494
    %v496 = vpop.f32.mrf.mxu0
    %497 = vmatprep.mubr.f32.mxu0 0.0
    %498 = vmatmul.mubr.f32.gmra.mxu0 %v396
    %v499 = vpop.f32.mrf.mxu0
    %v500 = vadd.f32 0.0, %v499
    %v501 = vpop.f32.mrf.mxu0
    %502 = vdwg.mxu0
    %v503 = vld [vmem:[#allocation2] sm:$0xff]
    %v504 = vld [vmem:[#allocation2 + $0x8] sm:$0xff]
    %v505 = vld [vmem:[#allocation2 + $0x10] sm:$0xff]
    %v506 = vld [vmem:[#allocation2 + $0x18] sm:$0xff]
    %v507 = vld [vmem:[#allocation2 + $0x20] sm:$0xff]
    %v508 = vld [vmem:[#allocation2 + $0x28] sm:$0xff]
    %v509 = vld [vmem:[#allocation2 + $0x30] sm:$0xff]
    %v510 = vld [vmem:[#allocation2 + $0x38] sm:$0xff]
    %v512 = vlaneseq
    %v513 = vshrl.u32 %v512, 7
    %v514 = vsub.s32 0, %v513
    %v515 = vrot.slane %v373, %v514
    %v518 = vsel %vm231, %v503, 0
    %v521 = vsel %vm231, %v504, 0
    %v524 = vsel %vm231, %v505, 0
    %v527 = vsel %vm231, %v506, 0
    %v530 = vsel %vm231, %v507, 0
    %v533 = vsel %vm231, %v508, 0
    %v536 = vsel %vm231, %v509, 0
    %v539 = vsel %vm231, %v510, 0
    %541 = vmatprep.subr.mxu0 0.0
    %542 = vmatpush1.msra.mxu0 0.0
    %543 = vmatprep.subr.mxu0 0.0
    %544 = vmatpush1.msra.mxu0 0.0
    %545 = vmatprep.subr.mxu0 0.0
    %546 = vmatpush1.msra.mxu0 0.0
    %547 = vmatprep.subr.mxu0 0.0
    %548 = vmatpush1.msra.mxu0 0.0
    %549 = vmatprep.subr.mxu0 0.0
    %550 = vmatpush1.msra.mxu0 0.0
    %551 = vmatprep.subr.mxu0 0.0
    %552 = vmatpush1.msra.mxu0 0.0
    %553 = vmatprep.subr.mxu0 0.0
    %554 = vmatpush1.msra.mxu0 0.0
    %555 = vmatprep.subr.mxu0 0.0
    %556 = vmatpush1.msra.mxu0 0.0
    %557 = vmatprep.subr.mxu0 0.0
    %558 = vmatpush1.msra.mxu0 %v500
    %559 = vmatprep.subr.mxu0 0.0
    %560 = vmatpush1.msra.mxu0 %v495
    %561 = vmatprep.subr.mxu0 0.0
    %562 = vmatpush1.msra.mxu0 %v490
    %563 = vmatprep.subr.mxu0 0.0
    %564 = vmatpush1.msra.mxu0 %v485
    %565 = vmatprep.subr.mxu0 0.0
    %566 = vmatpush1.msra.mxu0 %v480
    %567 = vmatprep.subr.mxu0 0.0
    %568 = vmatpush1.msra.mxu0 %v475
    %569 = vmatprep.subr.mxu0 0.0
    %570 = vmatpush1.msra.mxu0 %v470
    %571 = vmatprep.subr.mxu0 0.0
    %572 = vmatpush1.msra.mxu0 %v465
    %573 = vmatprep.subr.mxu0 0.0
    %574 = vmatpush2.msra.mxu0 0.0
    %575 = vmatprep.subr.mxu0 0.0
    %576 = vmatpush2.msra.mxu0 0.0
    %577 = vmatprep.subr.mxu0 0.0
    %578 = vmatpush2.msra.mxu0 0.0
    %579 = vmatprep.subr.mxu0 0.0
    %580 = vmatpush2.msra.mxu0 0.0
    %581 = vmatprep.subr.mxu0 0.0
    %582 = vmatpush2.msra.mxu0 0.0
    %583 = vmatprep.subr.mxu0 0.0
    %584 = vmatpush2.msra.mxu0 0.0
    %585 = vmatprep.subr.mxu0 0.0
    %586 = vmatpush2.msra.mxu0 0.0
    %587 = vmatprep.subr.mxu0 0.0
    %588 = vmatpush2.msra.mxu0 0.0
    %589 = vmatprep.subr.mxu0 0.0
    %590 = vmatpush2.msra.mxu0 0.0
    %591 = vmatprep.subr.mxu0 0.0
    %592 = vmatpush2.msra.mxu0 0.0
    %593 = vmatprep.subr.mxu0 0.0
    %594 = vmatpush2.msra.mxu0 0.0
    %595 = vmatprep.subr.mxu0 0.0
    %596 = vmatpush2.msra.mxu0 0.0
    %597 = vmatprep.subr.mxu0 0.0
    %598 = vmatpush2.msra.mxu0 0.0
    %599 = vmatprep.subr.mxu0 0.0
    %600 = vmatpush2.msra.mxu0 0.0
    %601 = vmatprep.subr.mxu0 0.0
    %602 = vmatpush2.msra.mxu0 0.0
    %603 = vmatprep.subr.mxu0 0.0
    %604 = vmatpush2.msra.mxu0 0.0
    %605 = vmatprep.mubr.f32.mxu0 0.0
    %606 = vmatmul.mubr.f32.gmra.mxu0 %v518
    %v607 = vpop.f32.mrf.mxu0
    %v608 = vadd.f32 %v515, %v607
    %v609 = vpop.f32.mrf.mxu0
    %610 = vmatprep.mubr.f32.mxu0 0.0
    %611 = vmatmul.mubr.f32.gmra.mxu0 %v521
    %v612 = vpop.f32.mrf.mxu0
    %v613 = vadd.f32 %v515, %v612
    %v614 = vpop.f32.mrf.mxu0
    %615 = vmatprep.mubr.f32.mxu0 0.0
    %616 = vmatmul.mubr.f32.gmra.mxu0 %v524
    %v617 = vpop.f32.mrf.mxu0
    %v618 = vadd.f32 %v515, %v617
    %v619 = vpop.f32.mrf.mxu0
    %620 = vmatprep.mubr.f32.mxu0 0.0
    %621 = vmatmul.mubr.f32.gmra.mxu0 %v527
    %v622 = vpop.f32.mrf.mxu0
    %v623 = vadd.f32 %v515, %v622
    %v624 = vpop.f32.mrf.mxu0
    %625 = vmatprep.mubr.f32.mxu0 0.0
    %626 = vmatmul.mubr.f32.gmra.mxu0 %v530
    %v627 = vpop.f32.mrf.mxu0
    %v628 = vadd.f32 %v515, %v627
    %v629 = vpop.f32.mrf.mxu0
    %630 = vmatprep.mubr.f32.mxu0 0.0
    %631 = vmatmul.mubr.f32.gmra.mxu0 %v533
    %v632 = vpop.f32.mrf.mxu0
    %v633 = vadd.f32 %v515, %v632
    %v634 = vpop.f32.mrf.mxu0
    %635 = vmatprep.mubr.f32.mxu0 0.0
    %636 = vmatmul.mubr.f32.gmra.mxu0 %v536
    %v637 = vpop.f32.mrf.mxu0
    %v638 = vadd.f32 %v515, %v637
    %v639 = vpop.f32.mrf.mxu0
    %640 = vmatprep.mubr.f32.mxu0 0.0
    %641 = vmatmul.mubr.f32.gmra.mxu0 %v539
    %v642 = vpop.f32.mrf.mxu0
    %v643 = vadd.f32 %v515, %v642
    %v644 = vpop.f32.mrf.mxu0
    %645 = vdwg.mxu0
    %v646 = vmax.f32 %v608, 0.0
    %v647 = vmax.f32 %v613, 0.0
    %v648 = vmax.f32 %v618, 0.0
    %v649 = vmax.f32 %v623, 0.0
    %v650 = vmax.f32 %v628, 0.0
    %v651 = vmax.f32 %v633, 0.0
    %v652 = vmax.f32 %v638, 0.0
    %v653 = vmax.f32 %v643, 0.0
    %v654 = vld [vmem:[#allocation7] sm:$0xff]
    %v655 = vld [vmem:[#allocation7 + $0x8] sm:$0xff]
    %v656 = vld [vmem:[#allocation7 + $0x10] sm:$0xff]
    %v657 = vld [vmem:[#allocation7 + $0x18] sm:$0xff]
    %v658 = vld [vmem:[%s8] sm:$0x1]
    %v660 = vlaneseq
    %v661 = vshrl.u32 %v660, 7
    %v662 = vsub.s32 0, %v661
    %v663 = vrot.slane %v658, %v662
    %v666 = vsel %vm87, %v646, 0
    %v669 = vsel %vm87, %v647, 0
    %v672 = vsel %vm87, %v648, 0
    %v675 = vsel %vm87, %v649, 0
    %v678 = vsel %vm87, %v650, 0
    %v681 = vsel %vm87, %v651, 0
    %v684 = vsel %vm87, %v652, 0
    %v687 = vsel %vm87, %v653, 0
    %689 = vmatprep.subr.mxu0 0.0
    %690 = vmatpush1.msra.mxu0 0.0
    %691 = vmatprep.subr.mxu0 0.0
    %692 = vmatpush1.msra.mxu0 0.0
    %693 = vmatprep.subr.mxu0 0.0
    %694 = vmatpush1.msra.mxu0 0.0
    %695 = vmatprep.subr.mxu0 0.0
    %696 = vmatpush1.msra.mxu0 0.0
    %697 = vmatprep.subr.mxu0 0.0
    %698 = vmatpush1.msra.mxu0 0.0
    %699 = vmatprep.subr.mxu0 0.0
    %700 = vmatpush1.msra.mxu0 0.0
    %701 = vmatprep.subr.mxu0 0.0
    %702 = vmatpush1.msra.mxu0 0.0
    %703 = vmatprep.subr.mxu0 0.0
    %704 = vmatpush1.msra.mxu0 0.0
    %705 = vmatprep.subr.mxu0 0.0
    %706 = vmatpush1.msra.mxu0 0.0
    %707 = vmatprep.subr.mxu0 0.0
    %708 = vmatpush1.msra.mxu0 0.0
    %709 = vmatprep.subr.mxu0 0.0
    %710 = vmatpush1.msra.mxu0 0.0
    %711 = vmatprep.subr.mxu0 0.0
    %712 = vmatpush1.msra.mxu0 0.0
    %713 = vmatprep.subr.mxu0 0.0
    %714 = vmatpush1.msra.mxu0 %v657
    %715 = vmatprep.subr.mxu0 0.0
    %716 = vmatpush1.msra.mxu0 %v656
    %717 = vmatprep.subr.mxu0 0.0
    %718 = vmatpush1.msra.mxu0 %v655
    %719 = vmatprep.subr.mxu0 0.0
    %720 = vmatpush1.msra.mxu0 %v654
    %721 = vmatprep.subr.mxu0 0.0
    %722 = vmatpush2.msra.mxu0 0.0
    %723 = vmatprep.subr.mxu0 0.0
    %724 = vmatpush2.msra.mxu0 0.0
    %725 = vmatprep.subr.mxu0 0.0
    %726 = vmatpush2.msra.mxu0 0.0
    %727 = vmatprep.subr.mxu0 0.0
    %728 = vmatpush2.msra.mxu0 0.0
    %729 = vmatprep.subr.mxu0 0.0
    %730 = vmatpush2.msra.mxu0 0.0
    %731 = vmatprep.subr.mxu0 0.0
    %732 = vmatpush2.msra.mxu0 0.0
    %733 = vmatprep.subr.mxu0 0.0
    %734 = vmatpush2.msra.mxu0 0.0
    %735 = vmatprep.subr.mxu0 0.0
    %736 = vmatpush2.msra.mxu0 0.0
    %737 = vmatprep.subr.mxu0 0.0
    %738 = vmatpush2.msra.mxu0 0.0
    %739 = vmatprep.subr.mxu0 0.0
    %740 = vmatpush2.msra.mxu0 0.0
    %741 = vmatprep.subr.mxu0 0.0
    %742 = vmatpush2.msra.mxu0 0.0
    %743 = vmatprep.subr.mxu0 0.0
    %744 = vmatpush2.msra.mxu0 0.0
    %745 = vmatprep.subr.mxu0 0.0
    %746 = vmatpush2.msra.mxu0 0.0
    %747 = vmatprep.subr.mxu0 0.0
    %748 = vmatpush2.msra.mxu0 0.0
    %749 = vmatprep.subr.mxu0 0.0
    %750 = vmatpush2.msra.mxu0 0.0
    %751 = vmatprep.subr.mxu0 0.0
    %752 = vmatpush2.msra.mxu0 0.0
    %753 = vmatprep.mubr.f32.mxu0 0.0
    %754 = vmatmul.mubr.f32.gmra.mxu0 %v666
    %v755 = vpop.f32.mrf.mxu0
    %v756 = vadd.f32 %v663, %v755
    %v757 = vpop.f32.mrf.mxu0
    %758 = vmatprep.mubr.f32.mxu0 0.0
    %759 = vmatmul.mubr.f32.gmra.mxu0 %v669
    %v760 = vpop.f32.mrf.mxu0
    %v761 = vadd.f32 %v663, %v760
    %v762 = vpop.f32.mrf.mxu0
    %763 = vmatprep.mubr.f32.mxu0 0.0
    %764 = vmatmul.mubr.f32.gmra.mxu0 %v672
    %v765 = vpop.f32.mrf.mxu0
    %v766 = vadd.f32 %v663, %v765
    %v767 = vpop.f32.mrf.mxu0
    %768 = vmatprep.mubr.f32.mxu0 0.0
    %769 = vmatmul.mubr.f32.gmra.mxu0 %v675
    %v770 = vpop.f32.mrf.mxu0
    %v771 = vadd.f32 %v663, %v770
    %v772 = vpop.f32.mrf.mxu0
    %773 = vmatprep.mubr.f32.mxu0 0.0
    %774 = vmatmul.mubr.f32.gmra.mxu0 %v678
    %v775 = vpop.f32.mrf.mxu0
    %v776 = vadd.f32 %v663, %v775
    %v777 = vpop.f32.mrf.mxu0
    %778 = vmatprep.mubr.f32.mxu0 0.0
    %779 = vmatmul.mubr.f32.gmra.mxu0 %v681
    %v780 = vpop.f32.mrf.mxu0
    %v781 = vadd.f32 %v663, %v780
    %v782 = vpop.f32.mrf.mxu0
    %783 = vmatprep.mubr.f32.mxu0 0.0
    %784 = vmatmul.mubr.f32.gmra.mxu0 %v684
    %v785 = vpop.f32.mrf.mxu0
    %v786 = vadd.f32 %v663, %v785
    %v787 = vpop.f32.mrf.mxu0
    %788 = vmatprep.mubr.f32.mxu0 0.0
    %789 = vmatmul.mubr.f32.gmra.mxu0 %v687
    %v790 = vpop.f32.mrf.mxu0
    %v791 = vadd.f32 %v663, %v790
    %v792 = vpop.f32.mrf.mxu0
    %793 = vdwg.mxu0
    %794 = vst [vmem:[#allocation8] sm:$0xff] %v756
    %795 = vst [vmem:[#allocation8 + $0x8] sm:$0xff] %v761
    %796 = vst [vmem:[#allocation8 + $0x10] sm:$0xff] %v766
    %797 = vst [vmem:[#allocation8 + $0x18] sm:$0xff] %v771
    %798 = vst [vmem:[#allocation8 + $0x20] sm:$0xff] %v776
    %799 = vst [vmem:[#allocation8 + $0x28] sm:$0xff] %v781
    %800 = vst [vmem:[#allocation8 + $0x30] sm:$0xff] %v786
    %801 = vst [vmem:[#allocation8 + $0x38] sm:$0xff] %v791
    // Predicated region
    $region50: #{tpu_custom_call.1} parent=1 // pred_check
      _
    $region51: #{tpu_custom_call.1} parent=1 // pred_check_branch
      %803 = sbr.rel (0) target = $region53
    $region52: #{tpu_custom_call.1} parent=1 // pred_region
      %s805 = ssub.s32 1024, 1024
      %806 = vsyncadd [#allocation4], %s805
      %s807 = sshll.u32 [#allocation8], 4
      %s808 = int_to_ptr.vmem [resolvable:$true] %s807
      %813 = dma.vmem_to_hbm [thread:$0]  %s808, 1024, %s9, [#allocation4], 128, 128, 8
    $region53: #{tpu_custom_call.1} parent=1 // pred_fallthru
      _
    // Predicated region
    $region54: #{tpu_custom_call.1} parent=1 // pred_check
      _
    $region55: #{tpu_custom_call.1} parent=1 // pred_check_branch
      %815 = sbr.rel (0) target = $region57
    $region56: #{tpu_custom_call.1} parent=1 // pred_region
      %816 = dma.done [#allocation4], 1024
    $region57: #{tpu_custom_call.1} parent=1 // pred_fallthru
      _
    %817 = vsyncpa [#allocation3], 1
    %818 = vsyncpa [#allocation6], 1
    %819 = vsyncpa [#allocation4], 1

</llo_original>
